<compile_context>
chip_gen: v7x
topology: tpu7x:2x2x1
jax: 0.10.0
libtpu: 0.0.40
codegen_flags: <defaults>
</compile_context>

<pallas_src>
import jax
import jax.numpy as jnp
from jax.experimental import pallas as pl
from jax.experimental.pallas import tpu as pltpu

LANE = 128                    # lanes per vreg
SUBLANE = 8                   # f32 sublanes per vreg
GRANULE = LANE * SUBLANE      # 1024 batch elements == one full f32 vreg
_MAX_BLOCK_COLS = 128 * 1024  # max batch elements per grid step (~1.5 MB of I/O)


def mlp_swish_kernel(params_ref, x_ref, o_ref):
    """Fused MLP on one batch block.

    params_ref: f32[55] in SMEM, flattened (w1, b1, w2, b2, w3, b3).
    x_ref:      f32[2, S, 128] in VMEM; x_ref[f] is the feature-f slab with the
                batch packed densely over sublanes and lanes.
    o_ref:      f32[S, 128] output slab.
    """
    x0 = x_ref[0]                         # (S, 128), full-occupancy vregs
    x1 = x_ref[1]                         # (S, 128)

    # Layer-2 partial accumulators: two independent chains per output row so
    # the 10-term reduction does not serialize on a single value.
    p00 = p01 = p10 = p11 = None
    for r in range(10):
        # Layer 1, hidden unit r:  h = w1[r,0]*x0 + w1[r,1]*x1 + b1[r]
        # (scalar-from-SMEM * slab ops -> pure VALU, no XLU broadcasts).
        h = (params_ref[2 * r] * x0
             + params_ref[2 * r + 1] * x1
             + params_ref[20 + r])
        h = h * jax.nn.sigmoid(h)         # Swish (sigmoid runs on the EUP slot)

        c0 = params_ref[30 + r] * h       # w2[0, r] * h
        c1 = params_ref[40 + r] * h       # w2[1, r] * h
        if r % 2 == 0:
            p00 = c0 if p00 is None else p00 + c0
            p10 = c1 if p10 is None else p10 + c1
        else:
            p01 = c0 if p01 is None else p01 + c0
            p11 = c1 if p11 is None else p11 + c1

    # Layer 2 bias + Tanh.
    h2_0 = jnp.tanh(p00 + p01 + params_ref[50])
    h2_1 = jnp.tanh(p10 + p11 + params_ref[51])

    # Layer 3 + Sigmoid (full-vreg, unmasked store).
    y = params_ref[52] * h2_0 + params_ref[53] * h2_1 + params_ref[54]
    o_ref[...] = jax.nn.sigmoid(y).astype(o_ref.dtype)


def _block_layout(batch):
    """Pick (s_block, num_blocks, padded_batch) for a given batch size."""
    n_gran = pl.cdiv(batch, GRANULE)
    max_gran_per_block = max(1, _MAX_BLOCK_COLS // GRANULE)
    if n_gran > 1:
        # Force >= 2 grid steps whenever possible so v7x's two TensorCores
        # both get work (the batch axis is marked "parallel").
        gran_per_block = min(max_gran_per_block, pl.cdiv(n_gran, 2))
    else:
        gran_per_block = 1
    num_blocks = pl.cdiv(n_gran, gran_per_block)
    s_block = gran_per_block * SUBLANE
    padded_batch = num_blocks * gran_per_block * GRANULE
    return int(s_block), int(num_blocks), int(padded_batch)


@jax.jit
def mlp_swish_forward(x, params):
    """x: (B, 2) float32. params: dict of PyTorch-layout weights. Returns (B, 1)."""
    B = x.shape[0]
    s_block, num_blocks, padded_b = _block_layout(B)
    total_s = num_blocks * s_block

    # All 55 weight/bias scalars, flattened, headed for SMEM.
    flat_params = jnp.concatenate([
        params["w1"].reshape(-1), params["b1"].reshape(-1),
        params["w2"].reshape(-1), params["b2"].reshape(-1),
        params["w3"].reshape(-1), params["b3"].reshape(-1),
    ]).astype(jnp.float32)                                  # f32[55]

    xp = x.astype(jnp.float32)
    if padded_b != B:
        xp = jnp.pad(xp, ((0, padded_b - B), (0, 0)))
    # Repack the batch densely over (sublane, lane): feature f -> (total_s, 128).
    # TODO(synk): this (B,2)->(2,B) relayout is one extra HBM pass; fold it into
    # the producer or de-interleave lanes in-kernel to remove it entirely.
    x_packed = xp.T.reshape(2, total_s, LANE)

    cost = pl.CostEstimate(
        flops=100 * padded_b,            # ~45 MACs + activation arithmetic / element
        transcendentals=13 * padded_b,   # 10 swish sigmoids + 2 tanh + 1 sigmoid
        bytes_accessed=12 * padded_b + 4 * flat_params.size,
    )

    out = pl.pallas_call(
        mlp_swish_kernel,
        out_shape=jax.ShapeDtypeStruct((total_s, LANE), jnp.float32),
        grid=(num_blocks,),
        in_specs=[
            pl.BlockSpec(memory_space=pltpu.MemorySpace.SMEM),    # weights/biases
            pl.BlockSpec((2, s_block, LANE), lambda i: (0, i, 0)),  # x slabs
        ],
        out_specs=pl.BlockSpec((s_block, LANE), lambda i: (i, 0)),
        compiler_params=pltpu.CompilerParams(
            dimension_semantics=("parallel",),
            vmem_limit_bytes=32 * 1024 * 1024,
        ),
        cost_estimate=cost,
    )(flat_params, x_packed)

    return out.reshape(-1)[:B].reshape(B, 1)


def init_params(key):
    """nn.Linear-style init (U[-1/sqrt(fan_in), +]). Weights stored PyTorch-style
    as (out_features, in_features); biases as (out_features, 1)."""
    ks = jax.random.split(key, 6)

    def linear(kw, kb, fan_in, fan_out):
        bound = 1.0 / jnp.sqrt(float(fan_in))
        w = jax.random.uniform(kw, (fan_out, fan_in), jnp.float32, -bound, bound)
        b = jax.random.uniform(kb, (fan_out, 1), jnp.float32, -bound, bound)
        return w, b

    w1, b1 = linear(ks[0], ks[1], 2, 10)
    w2, b2 = linear(ks[2], ks[3], 10, 2)
    w3, b3 = linear(ks[4], ks[5], 2, 1)
    return {"w1": w1, "b1": b1, "w2": w2, "b2": b2, "w3": w3, "b3": b3}


def reference_forward(x, p):
    """Pure-JAX reference (standard (batch, features) layout)."""
    h1 = x @ p["w1"].T + p["b1"].T
    h1 = h1 * jax.nn.sigmoid(h1)
    h2 = jnp.tanh(h1 @ p["w2"].T + p["b2"].T)
    return jax.nn.sigmoid(h2 @ p["w3"].T + p["b3"].T)


if __name__ == "__main__":
    key = jax.random.PRNGKey(0)
    k_params, k_x1, k_x2, k_x3 = jax.random.split(key, 4)
    params = init_params(k_params)

    # Tiny batch (pads 8 -> 1024 elements, single (8,128) block).
    x_small = jax.random.normal(k_x1, (8, 2), dtype=jnp.float32)
    out_small = jax.block_until_ready(mlp_swish_forward(x_small, params))
    ref_small = reference_forward(x_small, params)
    assert out_small.shape == (8, 1)
    assert jnp.allclose(out_small, ref_small, atol=1e-5, rtol=1e-5)

    # Non-multiple-of-granule batch (ragged padding, still one block).
    x_mid = jax.random.normal(k_x2, (300, 2), dtype=jnp.float32)
    out_mid = jax.block_until_ready(mlp_swish_forward(x_mid, params))
    ref_mid = reference_forward(x_mid, params)
    assert out_mid.shape == (300, 1)
    assert jnp.allclose(out_mid, ref_mid, atol=1e-5, rtol=1e-5)

    # Batch large enough to use a multi-step "parallel" grid (megacore path).
    x_big = jax.random.normal(k_x3, (2085, 2), dtype=jnp.float32)
    out_big = jax.block_until_ready(mlp_swish_forward(x_big, params))
    ref_big = reference_forward(x_big, params)
    assert out_big.shape == (2085, 1)
    assert jnp.allclose(out_big, ref_big, atol=1e-5, rtol=1e-5)

    print("KERNEL_OK")
</pallas_src>

<mosaic_0001>
module attributes {stable_mosaic.version = 11 : i64} {
  func.func @mlp_swish_kernel(%arg0: i32, %arg1: memref<55xf32, #tpu.memory_space<smem>>, %arg2: memref<2x8x128xf32, #tpu.memory_space<vmem>>, %arg3: memref<8x128xf32, #tpu.memory_space<vmem>>) attributes {dimension_semantics = [#tpu.dimension_semantics<parallel>], iteration_bounds = array<i64: 1>, scalar_prefetch = 0 : i64, scratch_operands = 0 : i64, tpu.core_type = #tpu.core_type<tc>, window_params = [{transform_indices = @transform_0, window_bounds = array<i64: 55>}, {transform_indices = @transform_1, window_bounds = array<i64: 2, 8, 128>}, {transform_indices = @transform_2, window_bounds = array<i64: 8, 128>}]} {
    %c0 = arith.constant 0 : index
    %c0_0 = arith.constant 0 : index
    %c0_1 = arith.constant 0 : index
    %0 = vector.load %arg2[%c0, %c0_0, %c0_1] : memref<2x8x128xf32, #tpu.memory_space<vmem>>, vector<1x8x128xf32>
    %1 = vector.shape_cast %0 : vector<1x8x128xf32> to vector<8x128xf32>
    %c1 = arith.constant 1 : index
    %c0_2 = arith.constant 0 : index
    %c0_3 = arith.constant 0 : index
    %2 = vector.load %arg2[%c1, %c0_2, %c0_3] : memref<2x8x128xf32, #tpu.memory_space<vmem>>, vector<1x8x128xf32>
    %3 = vector.shape_cast %2 : vector<1x8x128xf32> to vector<8x128xf32>
    %c0_4 = arith.constant 0 : index
    %4 = memref.load %arg1[%c0_4] : memref<55xf32, #tpu.memory_space<smem>>
    %5 = vector.broadcast %4 : f32 to vector<8x128xf32>
    %6 = arith.mulf %5, %1 : vector<8x128xf32>
    %c1_5 = arith.constant 1 : index
    %7 = memref.load %arg1[%c1_5] : memref<55xf32, #tpu.memory_space<smem>>
    %8 = vector.broadcast %7 : f32 to vector<8x128xf32>
    %9 = arith.mulf %8, %3 : vector<8x128xf32>
    %10 = arith.addf %6, %9 : vector<8x128xf32>
    %c20 = arith.constant 20 : index
    %11 = memref.load %arg1[%c20] : memref<55xf32, #tpu.memory_space<smem>>
    %12 = vector.broadcast %11 : f32 to vector<8x128xf32>
    %13 = arith.addf %10, %12 : vector<8x128xf32>
    %14 = arith.negf %13 : vector<8x128xf32>
    %15 = math.exp %14 : vector<8x128xf32>
    %cst = arith.constant 1.000000e+00 : f32
    %16 = vector.broadcast %cst : f32 to vector<8x128xf32>
    %17 = arith.addf %16, %15 : vector<8x128xf32>
    %18 = arith.divf %16, %17 : vector<8x128xf32>
    %19 = arith.mulf %13, %18 : vector<8x128xf32>
    %c30 = arith.constant 30 : index
    %20 = memref.load %arg1[%c30] : memref<55xf32, #tpu.memory_space<smem>>
    %21 = vector.broadcast %20 : f32 to vector<8x128xf32>
    %22 = arith.mulf %21, %19 : vector<8x128xf32>
    %c40 = arith.constant 40 : index
    %23 = memref.load %arg1[%c40] : memref<55xf32, #tpu.memory_space<smem>>
    %24 = vector.broadcast %23 : f32 to vector<8x128xf32>
    %25 = arith.mulf %24, %19 : vector<8x128xf32>
    %c2 = arith.constant 2 : index
    %26 = memref.load %arg1[%c2] : memref<55xf32, #tpu.memory_space<smem>>
    %27 = vector.broadcast %26 : f32 to vector<8x128xf32>
    %28 = arith.mulf %27, %1 : vector<8x128xf32>
    %c3 = arith.constant 3 : index
    %29 = memref.load %arg1[%c3] : memref<55xf32, #tpu.memory_space<smem>>
    %30 = vector.broadcast %29 : f32 to vector<8x128xf32>
    %31 = arith.mulf %30, %3 : vector<8x128xf32>
    %32 = arith.addf %28, %31 : vector<8x128xf32>
    %c21 = arith.constant 21 : index
    %33 = memref.load %arg1[%c21] : memref<55xf32, #tpu.memory_space<smem>>
    %34 = vector.broadcast %33 : f32 to vector<8x128xf32>
    %35 = arith.addf %32, %34 : vector<8x128xf32>
    %36 = arith.negf %35 : vector<8x128xf32>
    %37 = math.exp %36 : vector<8x128xf32>
    %cst_6 = arith.constant 1.000000e+00 : f32
    %38 = vector.broadcast %cst_6 : f32 to vector<8x128xf32>
    %39 = arith.addf %38, %37 : vector<8x128xf32>
    %40 = arith.divf %38, %39 : vector<8x128xf32>
    %41 = arith.mulf %35, %40 : vector<8x128xf32>
    %c31 = arith.constant 31 : index
    %42 = memref.load %arg1[%c31] : memref<55xf32, #tpu.memory_space<smem>>
    %43 = vector.broadcast %42 : f32 to vector<8x128xf32>
    %44 = arith.mulf %43, %41 : vector<8x128xf32>
    %c41 = arith.constant 41 : index
    %45 = memref.load %arg1[%c41] : memref<55xf32, #tpu.memory_space<smem>>
    %46 = vector.broadcast %45 : f32 to vector<8x128xf32>
    %47 = arith.mulf %46, %41 : vector<8x128xf32>
    %c4 = arith.constant 4 : index
    %48 = memref.load %arg1[%c4] : memref<55xf32, #tpu.memory_space<smem>>
    %49 = vector.broadcast %48 : f32 to vector<8x128xf32>
    %50 = arith.mulf %49, %1 : vector<8x128xf32>
    %c5 = arith.constant 5 : index
    %51 = memref.load %arg1[%c5] : memref<55xf32, #tpu.memory_space<smem>>
    %52 = vector.broadcast %51 : f32 to vector<8x128xf32>
    %53 = arith.mulf %52, %3 : vector<8x128xf32>
    %54 = arith.addf %50, %53 : vector<8x128xf32>
    %c22 = arith.constant 22 : index
    %55 = memref.load %arg1[%c22] : memref<55xf32, #tpu.memory_space<smem>>
    %56 = vector.broadcast %55 : f32 to vector<8x128xf32>
    %57 = arith.addf %54, %56 : vector<8x128xf32>
    %58 = arith.negf %57 : vector<8x128xf32>
    %59 = math.exp %58 : vector<8x128xf32>
    %cst_7 = arith.constant 1.000000e+00 : f32
    %60 = vector.broadcast %cst_7 : f32 to vector<8x128xf32>
    %61 = arith.addf %60, %59 : vector<8x128xf32>
    %62 = arith.divf %60, %61 : vector<8x128xf32>
    %63 = arith.mulf %57, %62 : vector<8x128xf32>
    %c32 = arith.constant 32 : index
    %64 = memref.load %arg1[%c32] : memref<55xf32, #tpu.memory_space<smem>>
    %65 = vector.broadcast %64 : f32 to vector<8x128xf32>
    %66 = arith.mulf %65, %63 : vector<8x128xf32>
    %c42 = arith.constant 42 : index
    %67 = memref.load %arg1[%c42] : memref<55xf32, #tpu.memory_space<smem>>
    %68 = vector.broadcast %67 : f32 to vector<8x128xf32>
    %69 = arith.mulf %68, %63 : vector<8x128xf32>
    %70 = arith.addf %22, %66 : vector<8x128xf32>
    %71 = arith.addf %25, %69 : vector<8x128xf32>
    %c6 = arith.constant 6 : index
    %72 = memref.load %arg1[%c6] : memref<55xf32, #tpu.memory_space<smem>>
    %73 = vector.broadcast %72 : f32 to vector<8x128xf32>
    %74 = arith.mulf %73, %1 : vector<8x128xf32>
    %c7 = arith.constant 7 : index
    %75 = memref.load %arg1[%c7] : memref<55xf32, #tpu.memory_space<smem>>
    %76 = vector.broadcast %75 : f32 to vector<8x128xf32>
    %77 = arith.mulf %76, %3 : vector<8x128xf32>
    %78 = arith.addf %74, %77 : vector<8x128xf32>
    %c23 = arith.constant 23 : index
    %79 = memref.load %arg1[%c23] : memref<55xf32, #tpu.memory_space<smem>>
    %80 = vector.broadcast %79 : f32 to vector<8x128xf32>
    %81 = arith.addf %78, %80 : vector<8x128xf32>
    %82 = arith.negf %81 : vector<8x128xf32>
    %83 = math.exp %82 : vector<8x128xf32>
    %cst_8 = arith.constant 1.000000e+00 : f32
    %84 = vector.broadcast %cst_8 : f32 to vector<8x128xf32>
    %85 = arith.addf %84, %83 : vector<8x128xf32>
    %86 = arith.divf %84, %85 : vector<8x128xf32>
    %87 = arith.mulf %81, %86 : vector<8x128xf32>
    %c33 = arith.constant 33 : index
    %88 = memref.load %arg1[%c33] : memref<55xf32, #tpu.memory_space<smem>>
    %89 = vector.broadcast %88 : f32 to vector<8x128xf32>
    %90 = arith.mulf %89, %87 : vector<8x128xf32>
    %c43 = arith.constant 43 : index
    %91 = memref.load %arg1[%c43] : memref<55xf32, #tpu.memory_space<smem>>
    %92 = vector.broadcast %91 : f32 to vector<8x128xf32>
    %93 = arith.mulf %92, %87 : vector<8x128xf32>
    %94 = arith.addf %44, %90 : vector<8x128xf32>
    %95 = arith.addf %47, %93 : vector<8x128xf32>
    %c8 = arith.constant 8 : index
    %96 = memref.load %arg1[%c8] : memref<55xf32, #tpu.memory_space<smem>>
    %97 = vector.broadcast %96 : f32 to vector<8x128xf32>
    %98 = arith.mulf %97, %1 : vector<8x128xf32>
    %c9 = arith.constant 9 : index
    %99 = memref.load %arg1[%c9] : memref<55xf32, #tpu.memory_space<smem>>
    %100 = vector.broadcast %99 : f32 to vector<8x128xf32>
    %101 = arith.mulf %100, %3 : vector<8x128xf32>
    %102 = arith.addf %98, %101 : vector<8x128xf32>
    %c24 = arith.constant 24 : index
    %103 = memref.load %arg1[%c24] : memref<55xf32, #tpu.memory_space<smem>>
    %104 = vector.broadcast %103 : f32 to vector<8x128xf32>
    %105 = arith.addf %102, %104 : vector<8x128xf32>
    %106 = arith.negf %105 : vector<8x128xf32>
    %107 = math.exp %106 : vector<8x128xf32>
    %cst_9 = arith.constant 1.000000e+00 : f32
    %108 = vector.broadcast %cst_9 : f32 to vector<8x128xf32>
    %109 = arith.addf %108, %107 : vector<8x128xf32>
    %110 = arith.divf %108, %109 : vector<8x128xf32>
    %111 = arith.mulf %105, %110 : vector<8x128xf32>
    %c34 = arith.constant 34 : index
    %112 = memref.load %arg1[%c34] : memref<55xf32, #tpu.memory_space<smem>>
    %113 = vector.broadcast %112 : f32 to vector<8x128xf32>
    %114 = arith.mulf %113, %111 : vector<8x128xf32>
    %c44 = arith.constant 44 : index
    %115 = memref.load %arg1[%c44] : memref<55xf32, #tpu.memory_space<smem>>
    %116 = vector.broadcast %115 : f32 to vector<8x128xf32>
    %117 = arith.mulf %116, %111 : vector<8x128xf32>
    %118 = arith.addf %70, %114 : vector<8x128xf32>
    %119 = arith.addf %71, %117 : vector<8x128xf32>
    %c10 = arith.constant 10 : index
    %120 = memref.load %arg1[%c10] : memref<55xf32, #tpu.memory_space<smem>>
    %121 = vector.broadcast %120 : f32 to vector<8x128xf32>
    %122 = arith.mulf %121, %1 : vector<8x128xf32>
    %c11 = arith.constant 11 : index
    %123 = memref.load %arg1[%c11] : memref<55xf32, #tpu.memory_space<smem>>
    %124 = vector.broadcast %123 : f32 to vector<8x128xf32>
    %125 = arith.mulf %124, %3 : vector<8x128xf32>
    %126 = arith.addf %122, %125 : vector<8x128xf32>
    %c25 = arith.constant 25 : index
    %127 = memref.load %arg1[%c25] : memref<55xf32, #tpu.memory_space<smem>>
    %128 = vector.broadcast %127 : f32 to vector<8x128xf32>
    %129 = arith.addf %126, %128 : vector<8x128xf32>
    %130 = arith.negf %129 : vector<8x128xf32>
    %131 = math.exp %130 : vector<8x128xf32>
    %cst_10 = arith.constant 1.000000e+00 : f32
    %132 = vector.broadcast %cst_10 : f32 to vector<8x128xf32>
    %133 = arith.addf %132, %131 : vector<8x128xf32>
    %134 = arith.divf %132, %133 : vector<8x128xf32>
    %135 = arith.mulf %129, %134 : vector<8x128xf32>
    %c35 = arith.constant 35 : index
    %136 = memref.load %arg1[%c35] : memref<55xf32, #tpu.memory_space<smem>>
    %137 = vector.broadcast %136 : f32 to vector<8x128xf32>
    %138 = arith.mulf %137, %135 : vector<8x128xf32>
    %c45 = arith.constant 45 : index
    %139 = memref.load %arg1[%c45] : memref<55xf32, #tpu.memory_space<smem>>
    %140 = vector.broadcast %139 : f32 to vector<8x128xf32>
    %141 = arith.mulf %140, %135 : vector<8x128xf32>
    %142 = arith.addf %94, %138 : vector<8x128xf32>
    %143 = arith.addf %95, %141 : vector<8x128xf32>
    %c12 = arith.constant 12 : index
    %144 = memref.load %arg1[%c12] : memref<55xf32, #tpu.memory_space<smem>>
    %145 = vector.broadcast %144 : f32 to vector<8x128xf32>
    %146 = arith.mulf %145, %1 : vector<8x128xf32>
    %c13 = arith.constant 13 : index
    %147 = memref.load %arg1[%c13] : memref<55xf32, #tpu.memory_space<smem>>
    %148 = vector.broadcast %147 : f32 to vector<8x128xf32>
    %149 = arith.mulf %148, %3 : vector<8x128xf32>
    %150 = arith.addf %146, %149 : vector<8x128xf32>
    %c26 = arith.constant 26 : index
    %151 = memref.load %arg1[%c26] : memref<55xf32, #tpu.memory_space<smem>>
    %152 = vector.broadcast %151 : f32 to vector<8x128xf32>
    %153 = arith.addf %150, %152 : vector<8x128xf32>
    %154 = arith.negf %153 : vector<8x128xf32>
    %155 = math.exp %154 : vector<8x128xf32>
    %cst_11 = arith.constant 1.000000e+00 : f32
    %156 = vector.broadcast %cst_11 : f32 to vector<8x128xf32>
    %157 = arith.addf %156, %155 : vector<8x128xf32>
    %158 = arith.divf %156, %157 : vector<8x128xf32>
    %159 = arith.mulf %153, %158 : vector<8x128xf32>
    %c36 = arith.constant 36 : index
    %160 = memref.load %arg1[%c36] : memref<55xf32, #tpu.memory_space<smem>>
    %161 = vector.broadcast %160 : f32 to vector<8x128xf32>
    %162 = arith.mulf %161, %159 : vector<8x128xf32>
    %c46 = arith.constant 46 : index
    %163 = memref.load %arg1[%c46] : memref<55xf32, #tpu.memory_space<smem>>
    %164 = vector.broadcast %163 : f32 to vector<8x128xf32>
    %165 = arith.mulf %164, %159 : vector<8x128xf32>
    %166 = arith.addf %118, %162 : vector<8x128xf32>
    %167 = arith.addf %119, %165 : vector<8x128xf32>
    %c14 = arith.constant 14 : index
    %168 = memref.load %arg1[%c14] : memref<55xf32, #tpu.memory_space<smem>>
    %169 = vector.broadcast %168 : f32 to vector<8x128xf32>
    %170 = arith.mulf %169, %1 : vector<8x128xf32>
    %c15 = arith.constant 15 : index
    %171 = memref.load %arg1[%c15] : memref<55xf32, #tpu.memory_space<smem>>
    %172 = vector.broadcast %171 : f32 to vector<8x128xf32>
    %173 = arith.mulf %172, %3 : vector<8x128xf32>
    %174 = arith.addf %170, %173 : vector<8x128xf32>
    %c27 = arith.constant 27 : index
    %175 = memref.load %arg1[%c27] : memref<55xf32, #tpu.memory_space<smem>>
    %176 = vector.broadcast %175 : f32 to vector<8x128xf32>
    %177 = arith.addf %174, %176 : vector<8x128xf32>
    %178 = arith.negf %177 : vector<8x128xf32>
    %179 = math.exp %178 : vector<8x128xf32>
    %cst_12 = arith.constant 1.000000e+00 : f32
    %180 = vector.broadcast %cst_12 : f32 to vector<8x128xf32>
    %181 = arith.addf %180, %179 : vector<8x128xf32>
    %182 = arith.divf %180, %181 : vector<8x128xf32>
    %183 = arith.mulf %177, %182 : vector<8x128xf32>
    %c37 = arith.constant 37 : index
    %184 = memref.load %arg1[%c37] : memref<55xf32, #tpu.memory_space<smem>>
    %185 = vector.broadcast %184 : f32 to vector<8x128xf32>
    %186 = arith.mulf %185, %183 : vector<8x128xf32>
    %c47 = arith.constant 47 : index
    %187 = memref.load %arg1[%c47] : memref<55xf32, #tpu.memory_space<smem>>
    %188 = vector.broadcast %187 : f32 to vector<8x128xf32>
    %189 = arith.mulf %188, %183 : vector<8x128xf32>
    %190 = arith.addf %142, %186 : vector<8x128xf32>
    %191 = arith.addf %143, %189 : vector<8x128xf32>
    %c16 = arith.constant 16 : index
    %192 = memref.load %arg1[%c16] : memref<55xf32, #tpu.memory_space<smem>>
    %193 = vector.broadcast %192 : f32 to vector<8x128xf32>
    %194 = arith.mulf %193, %1 : vector<8x128xf32>
    %c17 = arith.constant 17 : index
    %195 = memref.load %arg1[%c17] : memref<55xf32, #tpu.memory_space<smem>>
    %196 = vector.broadcast %195 : f32 to vector<8x128xf32>
    %197 = arith.mulf %196, %3 : vector<8x128xf32>
    %198 = arith.addf %194, %197 : vector<8x128xf32>
    %c28 = arith.constant 28 : index
    %199 = memref.load %arg1[%c28] : memref<55xf32, #tpu.memory_space<smem>>
    %200 = vector.broadcast %199 : f32 to vector<8x128xf32>
    %201 = arith.addf %198, %200 : vector<8x128xf32>
    %202 = arith.negf %201 : vector<8x128xf32>
    %203 = math.exp %202 : vector<8x128xf32>
    %cst_13 = arith.constant 1.000000e+00 : f32
    %204 = vector.broadcast %cst_13 : f32 to vector<8x128xf32>
    %205 = arith.addf %204, %203 : vector<8x128xf32>
    %206 = arith.divf %204, %205 : vector<8x128xf32>
    %207 = arith.mulf %201, %206 : vector<8x128xf32>
    %c38 = arith.constant 38 : index
    %208 = memref.load %arg1[%c38] : memref<55xf32, #tpu.memory_space<smem>>
    %209 = vector.broadcast %208 : f32 to vector<8x128xf32>
    %210 = arith.mulf %209, %207 : vector<8x128xf32>
    %c48 = arith.constant 48 : index
    %211 = memref.load %arg1[%c48] : memref<55xf32, #tpu.memory_space<smem>>
    %212 = vector.broadcast %211 : f32 to vector<8x128xf32>
    %213 = arith.mulf %212, %207 : vector<8x128xf32>
    %214 = arith.addf %166, %210 : vector<8x128xf32>
    %215 = arith.addf %167, %213 : vector<8x128xf32>
    %c18 = arith.constant 18 : index
    %216 = memref.load %arg1[%c18] : memref<55xf32, #tpu.memory_space<smem>>
    %217 = vector.broadcast %216 : f32 to vector<8x128xf32>
    %218 = arith.mulf %217, %1 : vector<8x128xf32>
    %c19 = arith.constant 19 : index
    %219 = memref.load %arg1[%c19] : memref<55xf32, #tpu.memory_space<smem>>
    %220 = vector.broadcast %219 : f32 to vector<8x128xf32>
    %221 = arith.mulf %220, %3 : vector<8x128xf32>
    %222 = arith.addf %218, %221 : vector<8x128xf32>
    %c29 = arith.constant 29 : index
    %223 = memref.load %arg1[%c29] : memref<55xf32, #tpu.memory_space<smem>>
    %224 = vector.broadcast %223 : f32 to vector<8x128xf32>
    %225 = arith.addf %222, %224 : vector<8x128xf32>
    %226 = arith.negf %225 : vector<8x128xf32>
    %227 = math.exp %226 : vector<8x128xf32>
    %cst_14 = arith.constant 1.000000e+00 : f32
    %228 = vector.broadcast %cst_14 : f32 to vector<8x128xf32>
    %229 = arith.addf %228, %227 : vector<8x128xf32>
    %230 = arith.divf %228, %229 : vector<8x128xf32>
    %231 = arith.mulf %225, %230 : vector<8x128xf32>
    %c39 = arith.constant 39 : index
    %232 = memref.load %arg1[%c39] : memref<55xf32, #tpu.memory_space<smem>>
    %233 = vector.broadcast %232 : f32 to vector<8x128xf32>
    %234 = arith.mulf %233, %231 : vector<8x128xf32>
    %c49 = arith.constant 49 : index
    %235 = memref.load %arg1[%c49] : memref<55xf32, #tpu.memory_space<smem>>
    %236 = vector.broadcast %235 : f32 to vector<8x128xf32>
    %237 = arith.mulf %236, %231 : vector<8x128xf32>
    %238 = arith.addf %190, %234 : vector<8x128xf32>
    %239 = arith.addf %191, %237 : vector<8x128xf32>
    %240 = arith.addf %214, %238 : vector<8x128xf32>
    %c50 = arith.constant 50 : index
    %241 = memref.load %arg1[%c50] : memref<55xf32, #tpu.memory_space<smem>>
    %242 = vector.broadcast %241 : f32 to vector<8x128xf32>
    %243 = arith.addf %240, %242 : vector<8x128xf32>
    %244 = math.tanh %243 : vector<8x128xf32>
    %245 = arith.addf %215, %239 : vector<8x128xf32>
    %c51 = arith.constant 51 : index
    %246 = memref.load %arg1[%c51] : memref<55xf32, #tpu.memory_space<smem>>
    %247 = vector.broadcast %246 : f32 to vector<8x128xf32>
    %248 = arith.addf %245, %247 : vector<8x128xf32>
    %249 = math.tanh %248 : vector<8x128xf32>
    %c52 = arith.constant 52 : index
    %250 = memref.load %arg1[%c52] : memref<55xf32, #tpu.memory_space<smem>>
    %251 = vector.broadcast %250 : f32 to vector<8x128xf32>
    %252 = arith.mulf %251, %244 : vector<8x128xf32>
    %c53 = arith.constant 53 : index
    %253 = memref.load %arg1[%c53] : memref<55xf32, #tpu.memory_space<smem>>
    %254 = vector.broadcast %253 : f32 to vector<8x128xf32>
    %255 = arith.mulf %254, %249 : vector<8x128xf32>
    %256 = arith.addf %252, %255 : vector<8x128xf32>
    %c54 = arith.constant 54 : index
    %257 = memref.load %arg1[%c54] : memref<55xf32, #tpu.memory_space<smem>>
    %258 = vector.broadcast %257 : f32 to vector<8x128xf32>
    %259 = arith.addf %256, %258 : vector<8x128xf32>
    %260 = arith.negf %259 : vector<8x128xf32>
    %261 = math.exp %260 : vector<8x128xf32>
    %cst_15 = arith.constant 1.000000e+00 : f32
    %262 = vector.broadcast %cst_15 : f32 to vector<8x128xf32>
    %263 = arith.addf %262, %261 : vector<8x128xf32>
    %264 = arith.divf %262, %263 : vector<8x128xf32>
    %c0_16 = arith.constant 0 : index
    %c0_17 = arith.constant 0 : index
    %265 = vector.load %arg3[%c0_16, %c0_17] : memref<8x128xf32, #tpu.memory_space<vmem>>, vector<8x128xf32>
    tpu.vector_store %arg3[%c0_16, %c0_17], %264 {strides = array<i32>} : memref<8x128xf32, #tpu.memory_space<vmem>>, vector<8x128xf32>,
    return
  }
  func.func @transform_0(%arg0: i32) -> i32 {
    %c0_i32 = arith.constant 0 : i32
    %c0_i32_0 = arith.constant 0 : i32
    return %c0_i32 : i32
  }
  func.func @transform_1(%arg0: i32) -> (i32, i32, i32) {
    %c0_i32 = arith.constant 0 : i32
    %c0_i32_0 = arith.constant 0 : i32
    %c0_i32_1 = arith.constant 0 : i32
    return %c0_i32, %arg0, %c0_i32_0 : i32, i32, i32
  }
  func.func @transform_2(%arg0: i32) -> (i32, i32) {
    %c0_i32 = arith.constant 0 : i32
    %c0_i32_0 = arith.constant 0 : i32
    return %arg0, %c0_i32 : i32, i32
  }
}

</mosaic_0001>

<llo_original>
// kernel: mlp_swish_forward.1
$region0: #{mlp_swish_forward.1}
  #allocation0 [shape = 'u32[]', space=smem, size = 0x4, offset = 0x4, fixed_abs, tag = 'smem constant byte address 0x4 - core index']
  #allocation1 [shape = 'u32[144,128]{1,0:T(1,128)}', space=vmem, size = 0x12000, scoped, tag = 'internal scratch']
  %s0 = inlined_call_operand.vmem [shape: f32[55], index: 0, kind: input, shape index: {}]
  %s1 = inlined_call_operand.vmem [shape: f32[2,8,128], index: 1, kind: input, shape index: {}]
  %s2 = inlined_call_operand.vmem [shape: f32[8,128], index: 2, kind: output, shape index: {}]
  %s3 = sld [smem:[#allocation0]]
  $region22: #{mlp_swish_forward.1} parent=0
    _
  %s5 = ssub.s32 1, %s3
  %s6 = scalar_select 0, %s5, %s3
  $region1: #{mlp_swish_forward.1} parent=0
    #allocation2 [shape = 'u8[512]{0}', space=smem, size = 0x200, scoped, tag = 'input window, operand 0, single buffered']
    #allocation3 [shape = 's32[1]{0}', space=sflag, size = 0x4, scoped, tag = 'scoped memory for mlp_swish_forward.1']
    %7 = vsyncpa [#allocation3], 0
    // Predicated region
    $region2: #{mlp_swish_forward.1} parent=1 // pred_check
      _
    $region3: #{mlp_swish_forward.1} parent=1 // pred_check_branch
      %9 = sbr.rel (0) target = $region5
    $region4: #{mlp_swish_forward.1} parent=1 // pred_region
      %s11 = ssub.s32 16, 16
      %12 = vsyncadd [#allocation3], %s11
      %s14 = sshll.u32 %s0, 4
      %s15 = int_to_ptr.vmem [resolvable:$true] %s14
      %17 = dma.vmem_to_smem %s15, 16, [#allocation2], [#allocation3]
    $region5: #{mlp_swish_forward.1} parent=1 // pred_fallthru
      _
    // Predicated region
    $region6: #{mlp_swish_forward.1} parent=1 // pred_check
      _
    $region7: #{mlp_swish_forward.1} parent=1 // pred_check_branch
      %19 = sbr.rel (0) target = $region9
    $region8: #{mlp_swish_forward.1} parent=1 // pred_region
      _
    $region9: #{mlp_swish_forward.1} parent=1 // pred_fallthru
      _
    // Predicated region
    $region10: #{mlp_swish_forward.1} parent=1 // pred_check
      _
    $region11: #{mlp_swish_forward.1} parent=1 // pred_check_branch
      %21 = sbr.rel (0) target = $region13
    $region12: #{mlp_swish_forward.1} parent=1 // pred_region
      %22 = dma.done [#allocation3], 16
    $region13: #{mlp_swish_forward.1} parent=1 // pred_fallthru
      _
    %23 = sfence
    %v24 = vld [vmem:[%s1] sm:$0xff]
    %s25 = scalar_lea.vmem %s1, 8
    %v26 = vld [vmem:[%s25] sm:$0xff]
    %s27 = sld [smem:[#allocation2]]
    %v28 = vstv %s27
    %v29 = vmul.f32 %v28, %v24
    %s30 = sld [smem:[#allocation2 + $0x1]]
    %v31 = vstv %s30
    %v32 = vmul.f32 %v31, %v26
    %v33 = vadd.f32 %v29, %v32
    %s34 = sld [smem:[#allocation2 + $0x14]]
    %v35 = vstv %s34
    %v36 = vadd.f32 %v33, %v35
    %v37 = vxor.u32 %v36, 2147483648
    %v38 = vmul.f32 %v37, 1.442695
    %v39 = vpow.pop %v38
    %v40 = vadd.f32 %v39, 1.0
    %v41 = vrcp.pop %v40
    %v42 = vmul.f32 1.0, %v41
    %v43 = vmul.f32 %v36, %v42
    %s44 = sld [smem:[#allocation2 + $0x1e]]
    %v45 = vstv %s44
    %v46 = vmul.f32 %v45, %v43
    %s47 = sld [smem:[#allocation2 + $0x28]]
    %v48 = vstv %s47
    %v49 = vmul.f32 %v48, %v43
    %s50 = sld [smem:[#allocation2 + $0x2]]
    %v51 = vstv %s50
    %v52 = vmul.f32 %v51, %v24
    %s53 = sld [smem:[#allocation2 + $0x3]]
    %v54 = vstv %s53
    %v55 = vmul.f32 %v54, %v26
    %v56 = vadd.f32 %v52, %v55
    %s57 = sld [smem:[#allocation2 + $0x15]]
    %v58 = vstv %s57
    %v59 = vadd.f32 %v56, %v58
    %v60 = vxor.u32 %v59, 2147483648
    %v61 = vmul.f32 %v60, 1.442695
    %v62 = vpow.pop %v61
    %v63 = vadd.f32 %v62, 1.0
    %v64 = vrcp.pop %v63
    %v65 = vmul.f32 1.0, %v64
    %v66 = vmul.f32 %v59, %v65
    %s67 = sld [smem:[#allocation2 + $0x1f]]
    %v68 = vstv %s67
    %v69 = vmul.f32 %v68, %v66
    %s70 = sld [smem:[#allocation2 + $0x29]]
    %v71 = vstv %s70
    %v72 = vmul.f32 %v71, %v66
    %s73 = sld [smem:[#allocation2 + $0x4]]
    %v74 = vstv %s73
    %v75 = vmul.f32 %v74, %v24
    %s76 = sld [smem:[#allocation2 + $0x5]]
    %v77 = vstv %s76
    %v78 = vmul.f32 %v77, %v26
    %v79 = vadd.f32 %v75, %v78
    %s80 = sld [smem:[#allocation2 + $0x16]]
    %v81 = vstv %s80
    %v82 = vadd.f32 %v79, %v81
    %v83 = vxor.u32 %v82, 2147483648
    %v84 = vmul.f32 %v83, 1.442695
    %v85 = vpow.pop %v84
    %v86 = vadd.f32 %v85, 1.0
    %v87 = vrcp.pop %v86
    %v88 = vmul.f32 1.0, %v87
    %v89 = vmul.f32 %v82, %v88
    %s90 = sld [smem:[#allocation2 + $0x20]]
    %v91 = vstv %s90
    %v92 = vmul.f32 %v91, %v89
    %s93 = sld [smem:[#allocation2 + $0x2a]]
    %v94 = vstv %s93
    %v95 = vmul.f32 %v94, %v89
    %v96 = vadd.f32 %v46, %v92
    %v97 = vadd.f32 %v49, %v95
    %s98 = sld [smem:[#allocation2 + $0x6]]
    %v99 = vstv %s98
    %v100 = vmul.f32 %v99, %v24
    %s101 = sld [smem:[#allocation2 + $0x7]]
    %v102 = vstv %s101
    %v103 = vmul.f32 %v102, %v26
    %v104 = vadd.f32 %v100, %v103
    %s105 = sld [smem:[#allocation2 + $0x17]]
    %v106 = vstv %s105
    %v107 = vadd.f32 %v104, %v106
    %v108 = vxor.u32 %v107, 2147483648
    %v109 = vmul.f32 %v108, 1.442695
    %v110 = vpow.pop %v109
    %v111 = vadd.f32 %v110, 1.0
    %v112 = vrcp.pop %v111
    %v113 = vmul.f32 1.0, %v112
    %v114 = vmul.f32 %v107, %v113
    %s115 = sld [smem:[#allocation2 + $0x21]]
    %v116 = vstv %s115
    %v117 = vmul.f32 %v116, %v114
    %s118 = sld [smem:[#allocation2 + $0x2b]]
    %v119 = vstv %s118
    %v120 = vmul.f32 %v119, %v114
    %v121 = vadd.f32 %v69, %v117
    %v122 = vadd.f32 %v72, %v120
    %s123 = sld [smem:[#allocation2 + $0x8]]
    %v124 = vstv %s123
    %v125 = vmul.f32 %v124, %v24
    %s126 = sld [smem:[#allocation2 + $0x9]]
    %v127 = vstv %s126
    %v128 = vmul.f32 %v127, %v26
    %v129 = vadd.f32 %v125, %v128
    %s130 = sld [smem:[#allocation2 + $0x18]]
    %v131 = vstv %s130
    %v132 = vadd.f32 %v129, %v131
    %v133 = vxor.u32 %v132, 2147483648
    %v134 = vmul.f32 %v133, 1.442695
    %v135 = vpow.pop %v134
    %v136 = vadd.f32 %v135, 1.0
    %v137 = vrcp.pop %v136
    %v138 = vmul.f32 1.0, %v137
    %v139 = vmul.f32 %v132, %v138
    %s140 = sld [smem:[#allocation2 + $0x22]]
    %v141 = vstv %s140
    %v142 = vmul.f32 %v141, %v139
    %s143 = sld [smem:[#allocation2 + $0x2c]]
    %v144 = vstv %s143
    %v145 = vmul.f32 %v144, %v139
    %v146 = vadd.f32 %v96, %v142
    %v147 = vadd.f32 %v97, %v145
    %s148 = sld [smem:[#allocation2 + $0xa]]
    %v149 = vstv %s148
    %v150 = vmul.f32 %v149, %v24
    %s151 = sld [smem:[#allocation2 + $0xb]]
    %v152 = vstv %s151
    %v153 = vmul.f32 %v152, %v26
    %v154 = vadd.f32 %v150, %v153
    %s155 = sld [smem:[#allocation2 + $0x19]]
    %v156 = vstv %s155
    %v157 = vadd.f32 %v154, %v156
    %v158 = vxor.u32 %v157, 2147483648
    %v159 = vmul.f32 %v158, 1.442695
    %v160 = vpow.pop %v159
    %v161 = vadd.f32 %v160, 1.0
    %v162 = vrcp.pop %v161
    %v163 = vmul.f32 1.0, %v162
    %v164 = vmul.f32 %v157, %v163
    %s165 = sld [smem:[#allocation2 + $0x23]]
    %v166 = vstv %s165
    %v167 = vmul.f32 %v166, %v164
    %s168 = sld [smem:[#allocation2 + $0x2d]]
    %v169 = vstv %s168
    %v170 = vmul.f32 %v169, %v164
    %v171 = vadd.f32 %v121, %v167
    %v172 = vadd.f32 %v122, %v170
    %s173 = sld [smem:[#allocation2 + $0xc]]
    %v174 = vstv %s173
    %v175 = vmul.f32 %v174, %v24
    %s176 = sld [smem:[#allocation2 + $0xd]]
    %v177 = vstv %s176
    %v178 = vmul.f32 %v177, %v26
    %v179 = vadd.f32 %v175, %v178
    %s180 = sld [smem:[#allocation2 + $0x1a]]
    %v181 = vstv %s180
    %v182 = vadd.f32 %v179, %v181
    %v183 = vxor.u32 %v182, 2147483648
    %v184 = vmul.f32 %v183, 1.442695
    %v185 = vpow.pop %v184
    %v186 = vadd.f32 %v185, 1.0
    %v187 = vrcp.pop %v186
    %v188 = vmul.f32 1.0, %v187
    %v189 = vmul.f32 %v182, %v188
    %s190 = sld [smem:[#allocation2 + $0x24]]
    %v191 = vstv %s190
    %v192 = vmul.f32 %v191, %v189
    %s193 = sld [smem:[#allocation2 + $0x2e]]
    %v194 = vstv %s193
    %v195 = vmul.f32 %v194, %v189
    %v196 = vadd.f32 %v146, %v192
    %v197 = vadd.f32 %v147, %v195
    %s198 = sld [smem:[#allocation2 + $0xe]]
    %v199 = vstv %s198
    %v200 = vmul.f32 %v199, %v24
    %s201 = sld [smem:[#allocation2 + $0xf]]
    %v202 = vstv %s201
    %v203 = vmul.f32 %v202, %v26
    %v204 = vadd.f32 %v200, %v203
    %s205 = sld [smem:[#allocation2 + $0x1b]]
    %v206 = vstv %s205
    %v207 = vadd.f32 %v204, %v206
    %v208 = vxor.u32 %v207, 2147483648
    %v209 = vmul.f32 %v208, 1.442695
    %v210 = vpow.pop %v209
    %v211 = vadd.f32 %v210, 1.0
    %v212 = vrcp.pop %v211
    %v213 = vmul.f32 1.0, %v212
    %v214 = vmul.f32 %v207, %v213
    %s215 = sld [smem:[#allocation2 + $0x25]]
    %v216 = vstv %s215
    %v217 = vmul.f32 %v216, %v214
    %s218 = sld [smem:[#allocation2 + $0x2f]]
    %v219 = vstv %s218
    %v220 = vmul.f32 %v219, %v214
    %v221 = vadd.f32 %v171, %v217
    %v222 = vadd.f32 %v172, %v220
    %s223 = sld [smem:[#allocation2 + $0x10]]
    %v224 = vstv %s223
    %v225 = vmul.f32 %v224, %v24
    %s226 = sld [smem:[#allocation2 + $0x11]]
    %v227 = vstv %s226
    %v228 = vmul.f32 %v227, %v26
    %v229 = vadd.f32 %v225, %v228
    %s230 = sld [smem:[#allocation2 + $0x1c]]
    %v231 = vstv %s230
    %v232 = vadd.f32 %v229, %v231
    %v233 = vxor.u32 %v232, 2147483648
    %v234 = vmul.f32 %v233, 1.442695
    %v235 = vpow.pop %v234
    %v236 = vadd.f32 %v235, 1.0
    %v237 = vrcp.pop %v236
    %v238 = vmul.f32 1.0, %v237
    %v239 = vmul.f32 %v232, %v238
    %s240 = sld [smem:[#allocation2 + $0x26]]
    %v241 = vstv %s240
    %v242 = vmul.f32 %v241, %v239
    %s243 = sld [smem:[#allocation2 + $0x30]]
    %v244 = vstv %s243
    %v245 = vmul.f32 %v244, %v239
    %v246 = vadd.f32 %v196, %v242
    %v247 = vadd.f32 %v197, %v245
    %s248 = sld [smem:[#allocation2 + $0x12]]
    %v249 = vstv %s248
    %v250 = vmul.f32 %v249, %v24
    %s251 = sld [smem:[#allocation2 + $0x13]]
    %v252 = vstv %s251
    %v253 = vmul.f32 %v252, %v26
    %v254 = vadd.f32 %v250, %v253
    %s255 = sld [smem:[#allocation2 + $0x1d]]
    %v256 = vstv %s255
    %v257 = vadd.f32 %v254, %v256
    %v258 = vxor.u32 %v257, 2147483648
    %v259 = vmul.f32 %v258, 1.442695
    %v260 = vpow.pop %v259
    %v261 = vadd.f32 %v260, 1.0
    %v262 = vrcp.pop %v261
    %v263 = vmul.f32 1.0, %v262
    %v264 = vmul.f32 %v257, %v263
    %s265 = sld [smem:[#allocation2 + $0x27]]
    %v266 = vstv %s265
    %v267 = vmul.f32 %v266, %v264
    %s268 = sld [smem:[#allocation2 + $0x31]]
    %v269 = vstv %s268
    %v270 = vmul.f32 %v269, %v264
    %v271 = vadd.f32 %v221, %v267
    %v272 = vadd.f32 %v222, %v270
    %v273 = vadd.f32 %v246, %v271
    %s274 = sld [smem:[#allocation2 + $0x32]]
    %v275 = vstv %s274
    %v276 = vadd.f32 %v273, %v275
    %v277 = vtanh.pop %v276
    %v278 = vadd.f32 %v247, %v272
    %s279 = sld [smem:[#allocation2 + $0x33]]
    %v280 = vstv %s279
    %v281 = vadd.f32 %v278, %v280
    %v282 = vtanh.pop %v281
    %s283 = sld [smem:[#allocation2 + $0x34]]
    %v284 = vstv %s283
    %v285 = vmul.f32 %v284, %v277
    %s286 = sld [smem:[#allocation2 + $0x35]]
    %v287 = vstv %s286
    %v288 = vmul.f32 %v287, %v282
    %v289 = vadd.f32 %v285, %v288
    %s290 = sld [smem:[#allocation2 + $0x36]]
    %v291 = vstv %s290
    %v292 = vadd.f32 %v289, %v291
    %v293 = vxor.u32 %v292, 2147483648
    %v294 = vmul.f32 %v293, 1.442695
    %v295 = vpow.pop %v294
    %v296 = vadd.f32 %v295, 1.0
    %v297 = vrcp.pop %v296
    %v298 = vmul.f32 1.0, %v297
    %299 = vst [vmem:[%s2] sm:$0xff] %v298
    // Predicated region
    $region14: #{mlp_swish_forward.1} parent=1 // pred_check
      _
    $region15: #{mlp_swish_forward.1} parent=1 // pred_check_branch
      %301 = sbr.rel (0) target = $region17
    $region16: #{mlp_swish_forward.1} parent=1 // pred_region
      _
    $region17: #{mlp_swish_forward.1} parent=1 // pred_fallthru
      _
    // Predicated region
    $region18: #{mlp_swish_forward.1} parent=1 // pred_check
      _
    $region19: #{mlp_swish_forward.1} parent=1 // pred_check_branch
      %303 = sbr.rel (0) target = $region21
    $region20: #{mlp_swish_forward.1} parent=1 // pred_region
      _
    $region21: #{mlp_swish_forward.1} parent=1 // pred_fallthru
      _
    %304 = vsyncpa [#allocation3], 1

</llo_original>
